<compile_context>
chip_gen: v7x
topology: tpu7x:2x2x1
jax: 0.10.0
libtpu: 0.0.40
codegen_flags: <defaults>
</compile_context>

<pallas_src>
import functools

import jax
import jax.numpy as jnp
from jax.experimental import pallas as pl
from jax.experimental.pallas import tpu as pltpu


# Resident-table gate: safe headroom on v7x (64 MiB VMEM / 32 MiB scoped
# default); v5e/v6e have more physical VMEM so this is conservative there.
_VMEM_TABLE_BYTES_LIMIT = 24 * 1024 * 1024


def _resident_gather_kernel(ids_ref, table_ref, out_ref, *, K):
    # ids_ref:   (b_pad,) int32 in SMEM (scalar prefetch).
    # table_ref: (n_nodes, dim) resident in VMEM (same block every step).
    # out_ref:   (K, dim) output block for this step.
    i = pl.program_id(0)
    base = i * K
    rows = jnp.concatenate(
        [table_ref[pl.ds(ids_ref[base + k], 1), :] for k in range(K)], axis=0)
    rows = rows.astype(jnp.float32)                       # (K, dim)
    sq = jnp.sum(rows * rows, axis=-1, keepdims=True)     # XLU lane reduce
    # F.normalize eps: x / max(||x||, 1e-12) == x * rsqrt(max(||x||^2, 1e-24))
    inv = jax.lax.rsqrt(jnp.maximum(sq, 1e-24))           # EUP rsqrt
    out_ref[...] = (rows * inv).astype(out_ref.dtype)


def _make_streamed_kernel(K, NBUF, nsteps):
    L = NBUF - 1  # prefetch distance (slot written this step was freed last step)

    def kernel(ids_ref, table_hbm, out_ref, buf, sems):
        # ids_ref:   (b_pad,) int32 SMEM (scalar prefetch)
        # table_hbm: (n_nodes, dim) raw HBM ref
        # out_ref:   (K, dim) output block
        # buf:       VMEM (NBUF, K, dim) ring buffer
        # sems:      DMA semaphores (NBUF, K)
        i = pl.program_id(0)

        def issue(step, slot):
            for k in range(K):
                row = ids_ref[step * K + k]
                pltpu.make_async_copy(
                    table_hbm.at[pl.ds(row, 1), :],
                    buf.at[slot, pl.ds(k, 1), :],
                    sems.at[slot, k],
                ).start()

        @pl.when(i == 0)
        def _prime():
            for s in range(min(L, nsteps)):
                issue(s, s)

        slot = i % NBUF

        # Wait for this step's K row DMAs.
        for k in range(K):
            pltpu.make_async_copy(
                table_hbm.at[pl.ds(0, 1), :],
                buf.at[slot, pl.ds(k, 1), :],
                sems.at[slot, k],
            ).wait()

        # Keep L fetches in flight: prefetch step i+L into the slot freed at i-1.
        @pl.when(i + L < nsteps)
        def _prefetch():
            issue(i + L, (i + L) % NBUF)

        rows = buf[slot].astype(jnp.float32)               # (K, dim)
        sq = jnp.sum(rows * rows, axis=-1, keepdims=True)
        inv = jax.lax.rsqrt(jnp.maximum(sq, 1e-24))
        out_ref[...] = (rows * inv).astype(out_ref.dtype)

    return kernel


def embedding_lookup_normalized(emb_table, node_ids, *, force_streamed=False,
                                rows_per_step=None,
                                vmem_table_limit=_VMEM_TABLE_BYTES_LIMIT):
    """Gather emb_table rows at node_ids and L2-normalize each row (Pallas)."""
    n_nodes, dim = emb_table.shape
    b = int(node_ids.shape[0])
    dtype = emb_table.dtype
    itemsize = jnp.dtype(dtype).itemsize

    # Rows per grid step: fill whole (8,128) vregs (8 sublanes @32-bit,
    # 16 for packed 16-bit).
    K = rows_per_step if rows_per_step is not None else (16 if itemsize <= 2 else 8)
    nsteps = (b + K - 1) // K
    b_pad = nsteps * K

    ids = jnp.clip(node_ids.astype(jnp.int32), 0, n_nodes - 1)  # robustness: no OOB DMA
    if b_pad != b:
        ids = jnp.pad(ids, (0, b_pad - b))

    table_bytes = n_nodes * dim * itemsize
    use_resident = (not force_streamed) and (table_bytes <= vmem_table_limit)

    if use_resident:
        out = pl.pallas_call(
            functools.partial(_resident_gather_kernel, K=K),
            out_shape=jax.ShapeDtypeStruct((b_pad, dim), dtype),
            grid_spec=pltpu.PrefetchScalarGridSpec(
                num_scalar_prefetch=1,               # ids -> SMEM
                grid=(nsteps,),
                in_specs=[
                    # Whole table resident in VMEM: same block index every step
                    # -> DMA'd once, reused across the grid.
                    pl.BlockSpec((n_nodes, dim), lambda i, ids: (0, 0)),
                ],
                out_specs=pl.BlockSpec((K, dim), lambda i, ids: (i, 0)),
            ),
            compiler_params=pltpu.CompilerParams(
                dimension_semantics=("parallel",),
                vmem_limit_bytes=max(
                    32 * 1024 * 1024,
                    table_bytes + 8 * K * dim * itemsize + (1 << 20)),
            ),
        )(ids, emb_table)
    else:
        NBUF = 4
        out = pl.pallas_call(
            _make_streamed_kernel(K=K, NBUF=NBUF, nsteps=nsteps),
            out_shape=jax.ShapeDtypeStruct((b_pad, dim), dtype),
            grid_spec=pltpu.PrefetchScalarGridSpec(
                num_scalar_prefetch=1,               # ids -> SMEM
                grid=(nsteps,),
                in_specs=[pl.BlockSpec(memory_space=pl.ANY)],   # table stays in HBM
                out_specs=pl.BlockSpec((K, dim), lambda i, ids: (i, 0)),
                scratch_shapes=[
                    pltpu.VMEM((NBUF, K, dim), dtype),
                    pltpu.SemaphoreType.DMA((NBUF, K)),
                ],
            ),
            compiler_params=pltpu.CompilerParams(
                dimension_semantics=("arbitrary",)),
        )(ids, emb_table)

    return out[:b] if b_pad != b else out


def fixed_unigram_candidate_sampler(key, num_sampled, range_max, distortion, unigrams):
    # np.random.choice(range_max, num_sampled, p=deg**0.75/sum, replace=True)
    weights = unigrams ** distortion
    prob = weights / weights.sum()
    return jax.random.choice(key, range_max, shape=(num_sampled,), replace=True, p=prob)


def pale_embedding_forward(emb_table, deg, neg_sample_size, nodes,
                           neighbor_nodes=None, key=None):
    """Mirrors _PaleEmbedding.forward (gather + F.normalize, optional neg sampling)."""
    if neighbor_nodes is None:
        return embedding_lookup_normalized(emb_table, nodes)

    neg = fixed_unigram_candidate_sampler(
        key, num_sampled=neg_sample_size, range_max=deg.shape[0],
        distortion=0.75, unigrams=deg)

    # Fuse all three lookups into a single pallas_call (one launch, one
    # contiguous lane-dense output), then split.
    b = int(nodes.shape[0])
    nb = int(neighbor_nodes.shape[0])
    all_ids = jnp.concatenate([nodes.astype(jnp.int32),
                               neighbor_nodes.astype(jnp.int32),
                               neg.astype(jnp.int32)])
    all_out = embedding_lookup_normalized(emb_table, all_ids)
    node_output = all_out[:b]
    neighbor_output = all_out[b:b + nb]
    neg_output = all_out[b + nb:]
    return node_output, neighbor_output, neg_output


def _ref_lookup(emb_table, ids):
    rows = emb_table[ids]
    norm = jnp.maximum(jnp.linalg.norm(rows, axis=1, keepdims=True), 1e-12)
    return rows / norm


if __name__ == "__main__":
    key = jax.random.PRNGKey(0)
    k_emb, k_nodes, k_nei, k_deg, k_neg = jax.random.split(key, 5)

    n_nodes = 64
    embedding_dim = 128
    batch = 16
    neg_sample_size = 8

    # nn.Embedding default init: N(0, 1)
    emb_table = jax.random.normal(k_emb, (n_nodes, embedding_dim), dtype=jnp.float32)
    nodes = jax.random.randint(k_nodes, (batch,), 0, n_nodes, dtype=jnp.int32)
    neighbor_nodes = jax.random.randint(k_nei, (batch,), 0, n_nodes, dtype=jnp.int32)
    deg = jax.random.uniform(k_deg, (n_nodes,), minval=1.0, maxval=10.0,
                             dtype=jnp.float32)

    node_out, nei_out, neg_out = pale_embedding_forward(
        emb_table, deg, neg_sample_size, nodes, neighbor_nodes, key=k_neg)
    jax.block_until_ready((node_out, nei_out, neg_out))

    # Correctness check vs pure-JAX reference (same neg samples).
    neg_ids = fixed_unigram_candidate_sampler(k_neg, neg_sample_size, n_nodes,
                                              0.75, deg)
    assert node_out.shape == (batch, embedding_dim)
    assert nei_out.shape == (batch, embedding_dim)
    assert neg_out.shape == (neg_sample_size, embedding_dim)
    assert jnp.allclose(node_out, _ref_lookup(emb_table, nodes), atol=1e-5)
    assert jnp.allclose(nei_out, _ref_lookup(emb_table, neighbor_nodes), atol=1e-5)
    assert jnp.allclose(neg_out, _ref_lookup(emb_table, neg_ids), atol=1e-5)

    # Single-argument path (forward without neighbors) -> resident fast path.
    solo = pale_embedding_forward(emb_table, deg, neg_sample_size, nodes)
    jax.block_until_ready(solo)
    assert jnp.allclose(solo, _ref_lookup(emb_table, nodes), atol=1e-5)

    # Non-multiple-of-K batch exercises the padding path.
    odd = embedding_lookup_normalized(emb_table, nodes[:5])
    jax.block_until_ready(odd)
    assert odd.shape == (5, embedding_dim)
    assert jnp.allclose(odd, _ref_lookup(emb_table, nodes[:5]), atol=1e-5)

    # Streamed (large-table) fallback: manual-DMA ring-buffer gather.
    streamed = embedding_lookup_normalized(emb_table, nodes, force_streamed=True)
    jax.block_until_ready(streamed)
    assert jnp.allclose(streamed, _ref_lookup(emb_table, nodes), atol=1e-5)

    # TODO(synk): training loop / PaleEmbeddingLoss / Adam updates are
    # host-side orchestration in the original module and are not kernelized.
    print("KERNEL_OK")
</pallas_src>

<mosaic_0001>
module attributes {stable_mosaic.version = 11 : i64} {
  func.func @_resident_gather_kernel(%arg0: i32, %arg1: memref<40xi32, #tpu.memory_space<smem>>, %arg2: memref<64x128xf32, #tpu.memory_space<vmem>>, %arg3: memref<8x128xf32, #tpu.memory_space<vmem>>) attributes {dimension_semantics = [#tpu.dimension_semantics<parallel>], iteration_bounds = array<i64: 5>, scalar_prefetch = 1 : i64, scratch_operands = 0 : i64, tpu.core_type = #tpu.core_type<tc>, window_params = [{pipeline_mode = #tpu.pipeline_mode<synchronous>, transform_indices = @transform_0, window_bounds = array<i64: 64, 128>}, {transform_indices = @transform_1, window_bounds = array<i64: 8, 128>}]} {
    %c8_i32 = arith.constant 8 : i32
    %0 = arith.muli %arg0, %c8_i32 : i32
    %c0_i32 = arith.constant 0 : i32
    %1 = arith.addi %0, %c0_i32 : i32
    %2 = arith.index_cast %1 : i32 to index
    %3 = memref.load %arg1[%2] : memref<40xi32, #tpu.memory_space<smem>>
    %4 = arith.index_cast %3 : i32 to index
    %c0 = arith.constant 0 : index
    %5 = vector.load %arg2[%4, %c0] : memref<64x128xf32, #tpu.memory_space<vmem>>, vector<1x128xf32>
    %c1_i32 = arith.constant 1 : i32
    %6 = arith.addi %0, %c1_i32 : i32
    %7 = arith.index_cast %6 : i32 to index
    %8 = memref.load %arg1[%7] : memref<40xi32, #tpu.memory_space<smem>>
    %9 = arith.index_cast %8 : i32 to index
    %c0_0 = arith.constant 0 : index
    %10 = vector.load %arg2[%9, %c0_0] : memref<64x128xf32, #tpu.memory_space<vmem>>, vector<1x128xf32>
    %c2_i32 = arith.constant 2 : i32
    %11 = arith.addi %0, %c2_i32 : i32
    %12 = arith.index_cast %11 : i32 to index
    %13 = memref.load %arg1[%12] : memref<40xi32, #tpu.memory_space<smem>>
    %14 = arith.index_cast %13 : i32 to index
    %c0_1 = arith.constant 0 : index
    %15 = vector.load %arg2[%14, %c0_1] : memref<64x128xf32, #tpu.memory_space<vmem>>, vector<1x128xf32>
    %c3_i32 = arith.constant 3 : i32
    %16 = arith.addi %0, %c3_i32 : i32
    %17 = arith.index_cast %16 : i32 to index
    %18 = memref.load %arg1[%17] : memref<40xi32, #tpu.memory_space<smem>>
    %19 = arith.index_cast %18 : i32 to index
    %c0_2 = arith.constant 0 : index
    %20 = vector.load %arg2[%19, %c0_2] : memref<64x128xf32, #tpu.memory_space<vmem>>, vector<1x128xf32>
    %c4_i32 = arith.constant 4 : i32
    %21 = arith.addi %0, %c4_i32 : i32
    %22 = arith.index_cast %21 : i32 to index
    %23 = memref.load %arg1[%22] : memref<40xi32, #tpu.memory_space<smem>>
    %24 = arith.index_cast %23 : i32 to index
    %c0_3 = arith.constant 0 : index
    %25 = vector.load %arg2[%24, %c0_3] : memref<64x128xf32, #tpu.memory_space<vmem>>, vector<1x128xf32>
    %c5_i32 = arith.constant 5 : i32
    %26 = arith.addi %0, %c5_i32 : i32
    %27 = arith.index_cast %26 : i32 to index
    %28 = memref.load %arg1[%27] : memref<40xi32, #tpu.memory_space<smem>>
    %29 = arith.index_cast %28 : i32 to index
    %c0_4 = arith.constant 0 : index
    %30 = vector.load %arg2[%29, %c0_4] : memref<64x128xf32, #tpu.memory_space<vmem>>, vector<1x128xf32>
    %c6_i32 = arith.constant 6 : i32
    %31 = arith.addi %0, %c6_i32 : i32
    %32 = arith.index_cast %31 : i32 to index
    %33 = memref.load %arg1[%32] : memref<40xi32, #tpu.memory_space<smem>>
    %34 = arith.index_cast %33 : i32 to index
    %c0_5 = arith.constant 0 : index
    %35 = vector.load %arg2[%34, %c0_5] : memref<64x128xf32, #tpu.memory_space<vmem>>, vector<1x128xf32>
    %c7_i32 = arith.constant 7 : i32
    %36 = arith.addi %0, %c7_i32 : i32
    %37 = arith.index_cast %36 : i32 to index
    %38 = memref.load %arg1[%37] : memref<40xi32, #tpu.memory_space<smem>>
    %39 = arith.index_cast %38 : i32 to index
    %c0_6 = arith.constant 0 : index
    %40 = vector.load %arg2[%39, %c0_6] : memref<64x128xf32, #tpu.memory_space<vmem>>, vector<1x128xf32>
    %41 = tpu.concatenate %5, %10, %15, %20, %25, %30, %35, %40 in 0 : vector<1x128xf32>, vector<1x128xf32>, vector<1x128xf32>, vector<1x128xf32>, vector<1x128xf32>, vector<1x128xf32>, vector<1x128xf32>, vector<1x128xf32> -> vector<8x128xf32>
    %42 = arith.mulf %41, %41 : vector<8x128xf32>
    %cst = arith.constant dense<0.000000e+00> : vector<8xf32>
    %43 = vector.multi_reduction <add>, %42, %cst [1] : vector<8x128xf32> to vector<8xf32>
    %44 = vector.shape_cast %43 : vector<8xf32> to vector<8x1xf32>
    %cst_7 = arith.constant 1.000000e-24 : f32
    %45 = vector.broadcast %cst_7 : f32 to vector<8x1xf32>
    %46 = arith.maximumf %44, %45 : vector<8x1xf32>
    %47 = math.rsqrt %46 : vector<8x1xf32>
    %48 = vector.broadcast %47 : vector<8x1xf32> to vector<8x128xf32>
    %49 = arith.mulf %41, %48 : vector<8x128xf32>
    %c0_8 = arith.constant 0 : index
    %c0_9 = arith.constant 0 : index
    %50 = vector.load %arg3[%c0_8, %c0_9] : memref<8x128xf32, #tpu.memory_space<vmem>>, vector<8x128xf32>
    tpu.vector_store %arg3[%c0_8, %c0_9], %49 {strides = array<i32>} : memref<8x128xf32, #tpu.memory_space<vmem>>, vector<8x128xf32>,
    return
  }
  func.func @transform_0(%arg0: i32, %arg1: memref<40xi32, #tpu.memory_space<smem>>) -> (i32, i32) {
    %c0_i32 = arith.constant 0 : i32
    %c0_i32_0 = arith.constant 0 : i32
    %c0_i32_1 = arith.constant 0 : i32
    return %c0_i32, %c0_i32_0 : i32, i32
  }
  func.func @transform_1(%arg0: i32, %arg1: memref<40xi32, #tpu.memory_space<smem>>) -> (i32, i32) {
    %c0_i32 = arith.constant 0 : i32
    %c0_i32_0 = arith.constant 0 : i32
    return %arg0, %c0_i32 : i32, i32
  }
}

</mosaic_0001>

<llo_original>
// kernel: tpu_custom_call.1
$region0: #{tpu_custom_call.1}
  #allocation0 [shape = 'u32[]', space=smem, size = 0x4, offset = 0x4, fixed_abs, tag = 'smem constant byte address 0x4 - core index']
  #allocation1 [shape = 'u32[144,128]{1,0:T(1,128)}', space=vmem, size = 0x12000, scoped, tag = 'internal scratch']
  #allocation2 [shape = 's32[1]{0}', space=sflag, size = 0x4, scoped, tag = 'scoped memory for tpu_custom_call.1']
  #allocation3 [shape = 'u8[512]{0}', space=smem, size = 0x200, scoped, tag = 'prefetched SMEM operand 0']
  %s0 = inlined_call_operand.hbm [shape: s32[40], index: 0, kind: input, shape index: {}]
  %s1 = inlined_call_operand.hbm [shape: f32[64,128], index: 1, kind: input, shape index: {}]
  %s2 = inlined_call_operand.hbm [shape: f32[40,128], index: 2, kind: output, shape index: {}]
  %s3 = sld [smem:[#allocation0]]
  $region41: #{tpu_custom_call.1} parent=0
    _
  %s5 = ssub.s32 1, %s3
  %s6 = scalar_select 0, %s5, %s3
  %8 = dma.hbm_to_smem %s0, 16, [#allocation3], [#allocation2]
  %9 = dma.done [#allocation2], 16
  %10 = sfence
  $region1: #{tpu_custom_call.1} parent=0
    #allocation4 [shape = 'u8[32768]{0}', space=vmem, size = 0x8000, scoped, tag = 'input window, operand 1, single buffered']
    #allocation5 [shape = 's32[2]{0}', space=sflag, size = 0x8, scoped, tag = 'scoped memory for tpu_custom_call.1']
    #allocation6 [shape = 's32[2]{0}', space=sflag, size = 0x8, scoped, tag = 'scoped memory for tpu_custom_call.1']
    #allocation7 [shape = 'u8[8192]{0}', space=vmem, size = 0x2000, scoped, tag = 'output window, operand 0']
    %11 = vsyncpa [#allocation5], 0
    %12 = vsyncpa [#allocation6], 0
    %s13 = scalar_lea.sflag [#allocation6], 1
    %14 = vsyncpa %s13, 0
    loop: start=0, step=1, limit=7
    $region2: #{tpu_custom_call.1} parent=1 // loop_pre_header
      _
    $region3: #{tpu_custom_call.1} parent=1 // loop_header
      %s16 = sphi 0, %s20
      %p17 = scmp.ge.s32.totalorder %s16, 7
      %s24 = sphi 0, %s24
      %s26 = sphi 0, %s24
      %s27 = sphi 0, %s26
      %s41 = sphi 0, %s27
      %s47 = sphi 0, %s49
      %s50 = sphi 0, %s47
      %s51 = sphi 0, %s50
      %s67 = sphi 0, %s51
    $region4: #{tpu_custom_call.1} parent=1 // loop_header_branch
      %19 = sbr.rel (%p17) target = $region8
    $region5: #{tpu_custom_call.1} parent=1 // loop_body
      %s21 = ssub.s32 %s16, 1
      %s22 = ssub.s32 %s16, 2
      %s23 = sadd.s32 %s16, 1
      %s25 = sadd.s32 %s24, 1
      %p28 = scmp.eq.s32.totalorder %s16, 4
      %p29 = scmp.ne.s32.totalorder %s24, %s26
      %p30 = scmp.eq.s32.totalorder %s16, 0
      %p31 = por %p29, %p30
      %p32 = scmp.ne.s32.totalorder %s24, %s26
      %p33 = scmp.eq.s32.totalorder %s21, 4
      %p34 = por %p32, %p33
      %p35 = scmp.ne.s32.totalorder %s26, %s27
      %p36 = scmp.eq.s32.totalorder %s21, 0
      %p37 = por %p35, %p36
      %p38 = scmp.ne.s32.totalorder %s26, %s27
      %p39 = scmp.eq.s32.totalorder %s22, 4
      %p40 = por %p38, %p39
      %p42 = scmp.ne.s32.totalorder %s27, %s41
      %p43 = scmp.eq.s32.totalorder %s22, 0
      %p44 = por %p42, %p43
      %s45 = ssub.s32 %s16, %s23
      %p46 = scmp.eq.s32.totalorder %s45, 0
      %s48 = sadd.s32 %s47, 1
      %s49 = scalar_select %p46, %s47, %s48
      %p52 = pneg %p46
      %p53 = scmp.eq.s32.totalorder %s16, 4
      %p54 = por %p52, %p53
      %p55 = scmp.ne.s32.totalorder %s47, %s50
      %p56 = scmp.eq.s32.totalorder %s16, 0
      %p57 = por %p55, %p56
      %p58 = scmp.ne.s32.totalorder %s47, %s50
      %p59 = scmp.eq.s32.totalorder %s21, 4
      %p60 = por %p58, %p59
      %p61 = scmp.ne.s32.totalorder %s50, %s51
      %p62 = scmp.eq.s32.totalorder %s21, 0
      %p63 = por %p61, %p62
      %p64 = scmp.ne.s32.totalorder %s50, %s51
      %p65 = scmp.eq.s32.totalorder %s22, 4
      %p66 = por %p64, %p65
      %p68 = scmp.ne.s32.totalorder %s51, %s67
      %p69 = scmp.eq.s32.totalorder %s22, 0
      %p70 = por %p68, %p69
      %p71 = scmp.le.s32.totalorder 1, %s16
      %p72 = scmp.lt.s32.totalorder %s16, 6
      %p73 = pnand %p71, %p72
      %p74 = pneg %p73
      // Predicated region
      $region9: #{tpu_custom_call.1} parent=5 // pred_check
        _
      $region10: #{tpu_custom_call.1} parent=5 // pred_check_branch
        %76 = sbr.rel (%p73) target = $region12
      $region11: #{tpu_custom_call.1} parent=5 // pred_region
        %s77 = ssub.s32 %s16, 1
        // Predicated region
        $region13: #{tpu_custom_call.1} parent=11 // pred_check
          %p78 = pneg %p37
        $region14: #{tpu_custom_call.1} parent=11 // pred_check_branch
          %80 = sbr.rel (%p78) target = $region16
        $region15: #{tpu_custom_call.1} parent=11 // pred_region
          %s82 = ssub.s32 1024, 1024
          %83 = vsyncadd [#allocation5], %s82
          %s84 = sshll.u32 [#allocation4], 4
          %s85 = int_to_ptr.vmem [resolvable:$true] %s84
          %90 = dma.hbm_to_vmem [thread:$0]  %s1, 1024, %s85, [#allocation5], 128, 128, 8
        $region16: #{tpu_custom_call.1} parent=11 // pred_fallthru
          _
      $region12: #{tpu_custom_call.1} parent=5 // pred_fallthru
        _
      %p91 = scmp.lt.s32.totalorder %s16, 5
      // Predicated region
      $region17: #{tpu_custom_call.1} parent=5 // pred_check
        %p92 = pneg %p91
      $region18: #{tpu_custom_call.1} parent=5 // pred_check_branch
        %94 = sbr.rel (%p92) target = $region20
      $region19: #{tpu_custom_call.1} parent=5 // pred_region
        _
      $region20: #{tpu_custom_call.1} parent=5 // pred_fallthru
        _
      %p95 = scmp.le.s32.totalorder 1, %s16
      %p96 = scmp.lt.s32.totalorder %s16, 6
      %p97 = pnand %p95, %p96
      %p98 = pneg %p97
      // Predicated region
      $region21: #{tpu_custom_call.1} parent=5 // pred_check
        _
      $region22: #{tpu_custom_call.1} parent=5 // pred_check_branch
        %100 = sbr.rel (%p97) target = $region24
      $region23: #{tpu_custom_call.1} parent=5 // pred_region
        %s101 = ssub.s32 %s16, 1
        // Predicated region
        $region25: #{tpu_custom_call.1} parent=23 // pred_check
          %p102 = pneg %p37
        $region26: #{tpu_custom_call.1} parent=23 // pred_check_branch
          %104 = sbr.rel (%p102) target = $region28
        $region27: #{tpu_custom_call.1} parent=23 // pred_region
          %105 = dma.done [#allocation5], 1024
        $region28: #{tpu_custom_call.1} parent=23 // pred_fallthru
          _
        %p106 = pneg %p37
        %p107 = pneg %p34
        %p108 = pneg %p63
        %p109 = pneg %p60
        %s110 = sand.u32 %s50, 1
        %s111 = scalar_lea.sflag [#allocation6], %s110
        %s112 = sand.u32 %s50, 1
        %s113 = smul.addr %s112, 8
        %s114 = scalar_lea.vmem [#allocation7], %s113
        %s115 = smul.u32 %s21, 8
        %s116 = sld [smem:[#allocation3 + %s115]]
        %s117 = scalar_lea.vmem [#allocation4], %s116
        %v118 = vld [vmem:[%s117] sm:$0x1]
        %s119 = sadd.s32 %s115, 1
        %s120 = sld [smem:[#allocation3 + %s119]]
        %s121 = scalar_lea.vmem [#allocation4], %s120
        %v122 = vld [vmem:[%s121] sm:$0x1]
        %s123 = sadd.s32 %s115, 2
        %s124 = sld [smem:[#allocation3 + %s123]]
        %s125 = scalar_lea.vmem [#allocation4], %s124
        %v126 = vld [vmem:[%s125] sm:$0x1]
        %s127 = sadd.s32 %s115, 3
        %s128 = sld [smem:[#allocation3 + %s127]]
        %s129 = scalar_lea.vmem [#allocation4], %s128
        %v130 = vld [vmem:[%s129] sm:$0x1]
        %s131 = sadd.s32 %s115, 4
        %s132 = sld [smem:[#allocation3 + %s131]]
        %s133 = scalar_lea.vmem [#allocation4], %s132
        %v134 = vld [vmem:[%s133] sm:$0x1]
        %s135 = sadd.s32 %s115, 5
        %s136 = sld [smem:[#allocation3 + %s135]]
        %s137 = scalar_lea.vmem [#allocation4], %s136
        %v138 = vld [vmem:[%s137] sm:$0x1]
        %s139 = sadd.s32 %s115, 6
        %s140 = sld [smem:[#allocation3 + %s139]]
        %s141 = scalar_lea.vmem [#allocation4], %s140
        %v142 = vld [vmem:[%s141] sm:$0x1]
        %s143 = sadd.s32 %s115, 7
        %s144 = sld [smem:[#allocation3 + %s143]]
        %s145 = scalar_lea.vmem [#allocation4], %s144
        %v146 = vld [vmem:[%s145] sm:$0x1]
        %v148 = vrot.slane %v122, 7
        %v151 = vrot.slane %v126, 6
        %v154 = vrot.slane %v130, 5
        %v157 = vrot.slane %v134, 4
        %v160 = vrot.slane %v138, 3
        %v163 = vrot.slane %v142, 2
        %v166 = vrot.slane %v146, 1
        %vm168 = vcmask 1040384
        %v169 = vsel %vm168, %v118, %v148
        %vm170 = vcmask 1041408
        %v171 = vsel %vm170, %v169, %v151
        %vm172 = vcmask 1042432
        %v173 = vsel %vm172, %v171, %v154
        %vm174 = vcmask 1043456
        %v175 = vsel %vm174, %v173, %v157
        %vm176 = vcmask 1044480
        %v177 = vsel %vm176, %v175, %v160
        %vm178 = vcmask 1045504
        %v179 = vsel %vm178, %v177, %v163
        %vm180 = vcmask 1046528
        %v181 = vsel %vm180, %v179, %v166
        %v182 = vmul.f32 %v181, %v181
        %183 = vadd.xlane.f32.xlu0 %v182
        %v184 = vpop.xlane.xlu0 %183
        %v185 = vmax.f32 %v184, 1e-24
        %v186 = vrsqrt.pop %v185
        %v187 = vmul.f32 %v181, %v186
        %188 = vst [vmem:[%s114] sm:$0xff] %v187
        %s189 = sand.u32 %s50, 1
        %s190 = scalar_lea.sflag [#allocation6], %s189
        %s191 = sand.u32 %s50, 1
        %s192 = smul.addr %s191, 8
        %s193 = scalar_lea.vmem [#allocation7], %s192
        // Predicated region
        $region29: #{tpu_custom_call.1} parent=23 // pred_check
          %p194 = pneg %p60
        $region30: #{tpu_custom_call.1} parent=23 // pred_check_branch
          %196 = sbr.rel (%p194) target = $region32
        $region31: #{tpu_custom_call.1} parent=23 // pred_region
          %s198 = ssub.s32 128, 128
          %199 = vsyncadd %s190, %s198
          %s200 = smul.addr %s21, 128
          %s201 = scalar_lea.hbm %s2, %s200
          %s203 = sshll.u32 %s193, 4
          %s204 = int_to_ptr.vmem [resolvable:$true] %s203
          %206 = dma.vmem_to_hbm [thread:$0]  %s204, 128, %s201, %s190
        $region32: #{tpu_custom_call.1} parent=23 // pred_fallthru
          _
      $region24: #{tpu_custom_call.1} parent=5 // pred_fallthru
        _
      %p207 = scmp.le.s32.totalorder 2, %s16
      // Predicated region
      $region33: #{tpu_custom_call.1} parent=5 // pred_check
        %p208 = pneg %p207
      $region34: #{tpu_custom_call.1} parent=5 // pred_check_branch
        %210 = sbr.rel (%p208) target = $region36
      $region35: #{tpu_custom_call.1} parent=5 // pred_region
        %s211 = ssub.s32 %s16, 2
        // Predicated region
        $region37: #{tpu_custom_call.1} parent=35 // pred_check
          %p212 = pneg %p66
        $region38: #{tpu_custom_call.1} parent=35 // pred_check_branch
          %214 = sbr.rel (%p212) target = $region40
        $region39: #{tpu_custom_call.1} parent=35 // pred_region
          %s215 = sand.u32 %s51, 1
          %s216 = scalar_lea.sflag [#allocation6], %s215
          %s217 = sand.u32 %s51, 1
          %s218 = smul.addr %s217, 8
          %s219 = scalar_lea.vmem [#allocation7], %s218
          %220 = dma.done %s216, 128
        $region40: #{tpu_custom_call.1} parent=35 // pred_fallthru
          _
      $region36: #{tpu_custom_call.1} parent=5 // pred_fallthru
        _
    $region6: #{tpu_custom_call.1} parent=1 // loop_footer
      %s20 = sadd.s32 1, %s16
    $region7: #{tpu_custom_call.1} parent=1 // loop_footer_branch
      %15 = sbr.rel target = $region3
    $region8: #{tpu_custom_call.1} parent=1 // loop_exit
      _
    %221 = vsyncpa [#allocation5], 1
    %s222 = scalar_lea.sflag [#allocation5], 1
    %223 = vsyncpa %s222, 1
    %224 = vsyncpa [#allocation6], 1
    %s225 = scalar_lea.sflag [#allocation6], 1
    %226 = vsyncpa %s225, 1

</llo_original>
